<compile_context>
chip_gen: v7x
topology: tpu7x:2x2x1
jax: 0.10.0
libtpu: 0.0.40
codegen_flags: <defaults>
</compile_context>

<pallas_src>
import jax
import jax.numpy as jnp
from jax.experimental import pallas as pl
from jax.experimental.pallas import tpu as pltpu

LANE = 128
HIDDEN1, HIDDEN2, HIDDEN3 = 256, 128, 64  # logical hidden sizes (H3 padded to 128)
TB_MAX = 1024          # max batch rows per grid step (overhead-bound kernel -> big tiles)
SMALL_BATCH_XLA = 64   # below this, plain XLA forward beats Pallas fixed overhead


def _round_up(x, m):
    return (x + m - 1) // m * m


def _choose_tile(B, tb_max):
    """Pick (TB, B_pad) minimizing padding waste; even >=2 tiles for B>256 (v7x megacore)."""
    n_tiles = -(-B // tb_max)          # ceil
    if B > 256:
        n_tiles = max(n_tiles, 2)      # give both v7x TensorCores work
        if n_tiles % 2:
            n_tiles += 1               # even tile count -> balanced split across 2 TCs
    tb = _round_up(-(-B // n_tiles), 8)
    b_pad = _round_up(B, tb)
    return tb, b_pad


# ---------------------------------------------------------------------------
# Kernel
# ---------------------------------------------------------------------------
def dqn_kernel(x_ref,
               w1_ref, b1_ref,
               w2_ref, b2_ref,
               w3_ref, b3_ref,
               w4_ref, b4_ref,
               o_ref):
    # Layer 1: Linear(S, 256) + ReLU.  K=8 -> MXU latency-bound; keep f32 for
    # raw-state precision (cost is negligible).
    h = jnp.dot(x_ref[...], w1_ref[...], preferred_element_type=jnp.float32)
    h = jnp.maximum(h + b1_ref[...], 0.0)
    # Layer 2: Linear(256, 128) + ReLU (bf16 x bf16 -> f32 accum on MXU).
    h = jnp.dot(h.astype(jnp.bfloat16), w2_ref[...],
                preferred_element_type=jnp.float32)
    h = jnp.maximum(h + b2_ref[...], 0.0)
    # Layer 3: Linear(128, 64 -> 128 padded) + ReLU (padded lanes stay 0).
    h = jnp.dot(h.astype(jnp.bfloat16), w3_ref[...],
                preferred_element_type=jnp.float32)
    h = jnp.maximum(h + b3_ref[...], 0.0)
    # Layer 4: Linear(64, A -> 128 padded), no activation (padded lanes stay 0).
    h = jnp.dot(h.astype(jnp.bfloat16), w4_ref[...],
                preferred_element_type=jnp.float32)
    # bf16 output slab: lane-dense 128-wide store, half the writeback bytes.
    o_ref[...] = (h + b4_ref[...]).astype(o_ref.dtype)


# ---------------------------------------------------------------------------
# Wrapper
# ---------------------------------------------------------------------------
def dqn_forward(x, kparams, action_dim, *, tb_max=TB_MAX):
    """x: [B, state_dim] f32.  kparams: padded params from prepare_kernel_params."""
    B, S = x.shape

    # Tiny-batch fast path: Pallas fixed overhead can't amortize here.
    if B <= SMALL_BATCH_XLA:
        return _dqn_xla_forward(x, kparams, action_dim)

    TB, B_pad = _choose_tile(B, tb_max)
    if B_pad != B:
        x = jnp.pad(x, ((0, B_pad - B), (0, 0)))
    grid = (B_pad // TB,)

    def full_spec(shape):
        # Constant (0,0) index_map: block never changes -> stays VMEM-resident,
        # no re-DMA across grid steps.
        return pl.BlockSpec(shape, lambda i: (0, 0))

    w1, b1 = kparams["w1"], kparams["b1"]
    w2, b2 = kparams["w2"], kparams["b2"]
    w3, b3 = kparams["w3"], kparams["b3"]
    w4, b4 = kparams["w4"], kparams["b4"]

    weight_bytes = sum(int(a.size) * a.dtype.itemsize
                       for a in (w1, b1, w2, b2, w3, b3, w4, b4))
    flops = 2 * B_pad * (S * HIDDEN1 + HIDDEN1 * HIDDEN2
                         + HIDDEN2 * LANE + LANE * LANE)
    bytes_accessed = int(x.size) * 4 + B_pad * LANE * 2 + weight_bytes

    # Only needed if TB is ever pushed to >= 2048 (v5e scoped-VMEM default is 16 MiB).
    vmem_limit = (64 << 20) if TB >= 2048 else None

    out = pl.pallas_call(
        dqn_kernel,
        out_shape=jax.ShapeDtypeStruct((B_pad, LANE), jnp.bfloat16),
        grid_spec=pltpu.PrefetchScalarGridSpec(
            num_scalar_prefetch=0,
            grid=grid,
            in_specs=[
                pl.BlockSpec((TB, S), lambda i: (i, 0)),   # x: tiled over batch
                full_spec(w1.shape), full_spec(b1.shape),
                full_spec(w2.shape), full_spec(b2.shape),
                full_spec(w3.shape), full_spec(b3.shape),
                full_spec(w4.shape), full_spec(b4.shape),
            ],
            out_specs=pl.BlockSpec((TB, LANE), lambda i: (i, 0)),
        ),
        compiler_params=pltpu.CompilerParams(
            dimension_semantics=("parallel",),
            vmem_limit_bytes=vmem_limit),
        cost_estimate=pl.CostEstimate(
            flops=flops, transcendentals=0, bytes_accessed=bytes_accessed),
    )(x, w1, b1, w2, b2, w3, b3, w4, b4)

    return out[:B, :action_dim].astype(jnp.float32)


# ---------------------------------------------------------------------------
# Params
# ---------------------------------------------------------------------------
def init_params(key, state_dim, action_dim):
    """f32 params, PyTorch Linear default init U(-1/sqrt(fan_in), +1/sqrt(fan_in)).
    Weights are [in, out] (transpose of PyTorch's [out, in]); biases are [1, out]."""
    sizes = [(state_dim, HIDDEN1), (HIDDEN1, HIDDEN2),
             (HIDDEN2, HIDDEN3), (HIDDEN3, action_dim)]
    params = {}
    for i, (fan_in, fan_out) in enumerate(sizes, start=1):
        key, kw, kb = jax.random.split(key, 3)
        bound = 1.0 / jnp.sqrt(float(fan_in))
        params[f"w{i}"] = jax.random.uniform(
            kw, (fan_in, fan_out), jnp.float32, minval=-bound, maxval=bound)
        params[f"b{i}"] = jax.random.uniform(
            kb, (1, fan_out), jnp.float32, minval=-bound, maxval=bound)
    return params


def prepare_kernel_params(params):
    """Layer-1 weight stays f32; layers 2-4 cast to bf16. Narrow trailing dims
    zero-padded to 128 lanes (exact: padded lanes stay 0 through bias+ReLU)."""
    def pad2(a, rows, cols):
        return jnp.pad(a, ((0, rows - a.shape[0]), (0, cols - a.shape[1])))

    w3 = params["w3"]  # [128, 64]
    w4 = params["w4"]  # [64, A]
    return {
        "w1": params["w1"],                                   # f32 [S, 256]
        "b1": params["b1"],
        "w2": params["w2"].astype(jnp.bfloat16),              # [256, 128]
        "b2": params["b2"],
        "w3": pad2(w3, w3.shape[0], LANE).astype(jnp.bfloat16),  # [128, 128]
        "b3": pad2(params["b3"], 1, LANE),
        "w4": pad2(w4, LANE, LANE).astype(jnp.bfloat16),         # [128, 128]
        "b4": pad2(params["b4"], 1, LANE),
    }


# ---------------------------------------------------------------------------
# Plain-XLA forward (tiny-batch fast path + reference; mimics kernel precision)
# ---------------------------------------------------------------------------
def _dqn_xla_forward(x, kp, action_dim):
    h = jnp.dot(x, kp["w1"], preferred_element_type=jnp.float32) + kp["b1"]
    h = jnp.maximum(h, 0.0)
    h = jnp.dot(h.astype(jnp.bfloat16), kp["w2"],
                preferred_element_type=jnp.float32) + kp["b2"]
    h = jnp.maximum(h, 0.0)
    h = jnp.dot(h.astype(jnp.bfloat16), kp["w3"],
                preferred_element_type=jnp.float32) + kp["b3"]
    h = jnp.maximum(h, 0.0)
    h = jnp.dot(h.astype(jnp.bfloat16), kp["w4"],
                preferred_element_type=jnp.float32) + kp["b4"]
    return h[:, :action_dim]


def dqn_reference(x, kparams, action_dim):
    return _dqn_xla_forward(x, kparams, action_dim)


if __name__ == "__main__":
    key = jax.random.PRNGKey(0)
    state_dim = 8      # LunarLander observation dim
    action_dim = 4     # LunarLander action dim

    key, kx, kp_key = jax.random.split(key, 3)
    params = init_params(kp_key, state_dim, action_dim)
    kparams = prepare_kernel_params(params)

    # Tiny inference batch -> XLA fast path (no Pallas launch).
    x_small = jax.random.normal(kx, (2, state_dim), jnp.float32)
    out_small = jax.block_until_ready(dqn_forward(x_small, kparams, action_dim))
    ref_small = dqn_reference(x_small, kparams, action_dim)
    assert out_small.shape == (2, action_dim)
    assert jnp.allclose(out_small, ref_small, atol=3e-2, rtol=3e-2)

    # Single-tile Pallas path (TB=96, grid=(1,)).
    key, kx1 = jax.random.split(key)
    x1 = jax.random.normal(kx1, (96, state_dim), jnp.float32)
    out1 = jax.block_until_ready(dqn_forward(x1, kparams, action_dim))
    ref1 = dqn_reference(x1, kparams, action_dim)
    assert out1.shape == (96, action_dim)
    assert jnp.allclose(out1, ref1, atol=3e-2, rtol=3e-2)

    # Multi-tile Pallas path: B=600 -> 2 even tiles of 304 rows (B_pad=608).
    key, kx2 = jax.random.split(key)
    x2 = jax.random.normal(kx2, (600, state_dim), jnp.float32)
    out2 = jax.block_until_ready(dqn_forward(x2, kparams, action_dim))
    ref2 = dqn_reference(x2, kparams, action_dim)
    assert out2.shape == (600, action_dim)
    assert jnp.allclose(out2, ref2, atol=3e-2, rtol=3e-2)

    print("KERNEL_OK")
</pallas_src>

<mosaic_0001>
module attributes {stable_mosaic.version = 11 : i64} {
  func.func @dqn_kernel(%arg0: i32, %arg1: memref<96x8xf32, #tpu.memory_space<vmem>>, %arg2: memref<8x256xf32, #tpu.memory_space<vmem>>, %arg3: memref<1x256xf32, #tpu.memory_space<vmem>>, %arg4: memref<256x128xbf16, #tpu.memory_space<vmem>>, %arg5: memref<1x128xf32, #tpu.memory_space<vmem>>, %arg6: memref<128x128xbf16, #tpu.memory_space<vmem>>, %arg7: memref<1x128xf32, #tpu.memory_space<vmem>>, %arg8: memref<128x128xbf16, #tpu.memory_space<vmem>>, %arg9: memref<1x128xf32, #tpu.memory_space<vmem>>, %arg10: memref<96x128xbf16, #tpu.memory_space<vmem>>) attributes {dimension_semantics = [#tpu.dimension_semantics<parallel>], iteration_bounds = array<i64: 1>, scalar_prefetch = 0 : i64, scratch_operands = 0 : i64, tpu.core_type = #tpu.core_type<tc>, window_params = [{transform_indices = @transform_0, window_bounds = array<i64: 96, 8>}, {pipeline_mode = #tpu.pipeline_mode<synchronous>, transform_indices = @transform_1, window_bounds = array<i64: 8, 256>}, {pipeline_mode = #tpu.pipeline_mode<synchronous>, transform_indices = @transform_2, window_bounds = array<i64: 1, 256>}, {pipeline_mode = #tpu.pipeline_mode<synchronous>, transform_indices = @transform_3, window_bounds = array<i64: 256, 128>}, {pipeline_mode = #tpu.pipeline_mode<synchronous>, transform_indices = @transform_4, window_bounds = array<i64: 1, 128>}, {pipeline_mode = #tpu.pipeline_mode<synchronous>, transform_indices = @transform_5, window_bounds = array<i64: 128, 128>}, {pipeline_mode = #tpu.pipeline_mode<synchronous>, transform_indices = @transform_6, window_bounds = array<i64: 1, 128>}, {pipeline_mode = #tpu.pipeline_mode<synchronous>, transform_indices = @transform_7, window_bounds = array<i64: 128, 128>}, {pipeline_mode = #tpu.pipeline_mode<synchronous>, transform_indices = @transform_8, window_bounds = array<i64: 1, 128>}, {transform_indices = @transform_9, window_bounds = array<i64: 96, 128>}]} {
    %c0 = arith.constant 0 : index
    %c0_0 = arith.constant 0 : index
    %0 = vector.load %arg1[%c0, %c0_0] : memref<96x8xf32, #tpu.memory_space<vmem>>, vector<96x8xf32>
    %c0_1 = arith.constant 0 : index
    %c0_2 = arith.constant 0 : index
    %1 = vector.load %arg2[%c0_1, %c0_2] : memref<8x256xf32, #tpu.memory_space<vmem>>, vector<8x256xf32>
    %cst = arith.constant dense<0.000000e+00> : vector<96x256xf32>
    %2 = tpu.matmul %0, %1, %cst {dimension_numbers = #tpu.dot_dimension_numbers<[1], [0], [0], [1], [0, 0, 1, 1], [], []>} : vector<96x8xf32>, vector<8x256xf32>, vector<96x256xf32> -> vector<96x256xf32>
    %c0_3 = arith.constant 0 : index
    %c0_4 = arith.constant 0 : index
    %3 = vector.load %arg3[%c0_3, %c0_4] : memref<1x256xf32, #tpu.memory_space<vmem>>, vector<1x256xf32>
    %4 = vector.broadcast %3 : vector<1x256xf32> to vector<96x256xf32>
    %5 = arith.addf %2, %4 : vector<96x256xf32>
    %cst_5 = arith.constant 0.000000e+00 : f32
    %6 = vector.broadcast %cst_5 : f32 to vector<96x256xf32>
    %7 = arith.maximumf %5, %6 : vector<96x256xf32>
    %8 = arith.truncf %7 : vector<96x256xf32> to vector<96x256xbf16>
    %c0_6 = arith.constant 0 : index
    %c0_7 = arith.constant 0 : index
    %9 = vector.load %arg4[%c0_6, %c0_7] : memref<256x128xbf16, #tpu.memory_space<vmem>>, vector<256x128xbf16>
    %cst_8 = arith.constant dense<0.000000e+00> : vector<96x128xf32>
    %10 = tpu.matmul %8, %9, %cst_8 {dimension_numbers = #tpu.dot_dimension_numbers<[1], [0], [0], [1], [0, 0, 1, 1], [], []>} : vector<96x256xbf16>, vector<256x128xbf16>, vector<96x128xf32> -> vector<96x128xf32>
    %c0_9 = arith.constant 0 : index
    %c0_10 = arith.constant 0 : index
    %11 = vector.load %arg5[%c0_9, %c0_10] : memref<1x128xf32, #tpu.memory_space<vmem>>, vector<1x128xf32>
    %12 = vector.broadcast %11 : vector<1x128xf32> to vector<96x128xf32>
    %13 = arith.addf %10, %12 : vector<96x128xf32>
    %cst_11 = arith.constant 0.000000e+00 : f32
    %14 = vector.broadcast %cst_11 : f32 to vector<96x128xf32>
    %15 = arith.maximumf %13, %14 : vector<96x128xf32>
    %16 = arith.truncf %15 : vector<96x128xf32> to vector<96x128xbf16>
    %c0_12 = arith.constant 0 : index
    %c0_13 = arith.constant 0 : index
    %17 = vector.load %arg6[%c0_12, %c0_13] : memref<128x128xbf16, #tpu.memory_space<vmem>>, vector<128x128xbf16>
    %cst_14 = arith.constant dense<0.000000e+00> : vector<96x128xf32>
    %18 = tpu.matmul %16, %17, %cst_14 {dimension_numbers = #tpu.dot_dimension_numbers<[1], [0], [0], [1], [0, 0, 1, 1], [], []>} : vector<96x128xbf16>, vector<128x128xbf16>, vector<96x128xf32> -> vector<96x128xf32>
    %c0_15 = arith.constant 0 : index
    %c0_16 = arith.constant 0 : index
    %19 = vector.load %arg7[%c0_15, %c0_16] : memref<1x128xf32, #tpu.memory_space<vmem>>, vector<1x128xf32>
    %20 = vector.broadcast %19 : vector<1x128xf32> to vector<96x128xf32>
    %21 = arith.addf %18, %20 : vector<96x128xf32>
    %cst_17 = arith.constant 0.000000e+00 : f32
    %22 = vector.broadcast %cst_17 : f32 to vector<96x128xf32>
    %23 = arith.maximumf %21, %22 : vector<96x128xf32>
    %24 = arith.truncf %23 : vector<96x128xf32> to vector<96x128xbf16>
    %c0_18 = arith.constant 0 : index
    %c0_19 = arith.constant 0 : index
    %25 = vector.load %arg8[%c0_18, %c0_19] : memref<128x128xbf16, #tpu.memory_space<vmem>>, vector<128x128xbf16>
    %cst_20 = arith.constant dense<0.000000e+00> : vector<96x128xf32>
    %26 = tpu.matmul %24, %25, %cst_20 {dimension_numbers = #tpu.dot_dimension_numbers<[1], [0], [0], [1], [0, 0, 1, 1], [], []>} : vector<96x128xbf16>, vector<128x128xbf16>, vector<96x128xf32> -> vector<96x128xf32>
    %c0_21 = arith.constant 0 : index
    %c0_22 = arith.constant 0 : index
    %27 = vector.load %arg9[%c0_21, %c0_22] : memref<1x128xf32, #tpu.memory_space<vmem>>, vector<1x128xf32>
    %28 = vector.broadcast %27 : vector<1x128xf32> to vector<96x128xf32>
    %29 = arith.addf %26, %28 : vector<96x128xf32>
    %30 = arith.truncf %29 : vector<96x128xf32> to vector<96x128xbf16>
    %c0_23 = arith.constant 0 : index
    %c0_24 = arith.constant 0 : index
    %31 = vector.load %arg10[%c0_23, %c0_24] : memref<96x128xbf16, #tpu.memory_space<vmem>>, vector<96x128xbf16>
    tpu.vector_store %arg10[%c0_23, %c0_24], %30 {strides = array<i32>} : memref<96x128xbf16, #tpu.memory_space<vmem>>, vector<96x128xbf16>,
    return
  }
  func.func @transform_0(%arg0: i32) -> (i32, i32) {
    %c0_i32 = arith.constant 0 : i32
    %c0_i32_0 = arith.constant 0 : i32
    return %arg0, %c0_i32 : i32, i32
  }
  func.func @transform_1(%arg0: i32) -> (i32, i32) {
    %c0_i32 = arith.constant 0 : i32
    %c0_i32_0 = arith.constant 0 : i32
    %c0_i32_1 = arith.constant 0 : i32
    return %c0_i32, %c0_i32_0 : i32, i32
  }
  func.func @transform_2(%arg0: i32) -> (i32, i32) {
    %c0_i32 = arith.constant 0 : i32
    %c0_i32_0 = arith.constant 0 : i32
    %c0_i32_1 = arith.constant 0 : i32
    return %c0_i32, %c0_i32_0 : i32, i32
  }
  func.func @transform_3(%arg0: i32) -> (i32, i32) {
    %c0_i32 = arith.constant 0 : i32
    %c0_i32_0 = arith.constant 0 : i32
    %c0_i32_1 = arith.constant 0 : i32
    return %c0_i32, %c0_i32_0 : i32, i32
  }
  func.func @transform_4(%arg0: i32) -> (i32, i32) {
    %c0_i32 = arith.constant 0 : i32
    %c0_i32_0 = arith.constant 0 : i32
    %c0_i32_1 = arith.constant 0 : i32
    return %c0_i32, %c0_i32_0 : i32, i32
  }
  func.func @transform_5(%arg0: i32) -> (i32, i32) {
    %c0_i32 = arith.constant 0 : i32
    %c0_i32_0 = arith.constant 0 : i32
    %c0_i32_1 = arith.constant 0 : i32
    return %c0_i32, %c0_i32_0 : i32, i32
  }
  func.func @transform_6(%arg0: i32) -> (i32, i32) {
    %c0_i32 = arith.constant 0 : i32
    %c0_i32_0 = arith.constant 0 : i32
    %c0_i32_1 = arith.constant 0 : i32
    return %c0_i32, %c0_i32_0 : i32, i32
  }
  func.func @transform_7(%arg0: i32) -> (i32, i32) {
    %c0_i32 = arith.constant 0 : i32
    %c0_i32_0 = arith.constant 0 : i32
    %c0_i32_1 = arith.constant 0 : i32
    return %c0_i32, %c0_i32_0 : i32, i32
  }
  func.func @transform_8(%arg0: i32) -> (i32, i32) {
    %c0_i32 = arith.constant 0 : i32
    %c0_i32_0 = arith.constant 0 : i32
    %c0_i32_1 = arith.constant 0 : i32
    return %c0_i32, %c0_i32_0 : i32, i32
  }
  func.func @transform_9(%arg0: i32) -> (i32, i32) {
    %c0_i32 = arith.constant 0 : i32
    %c0_i32_0 = arith.constant 0 : i32
    return %arg0, %c0_i32 : i32, i32
  }
}

</mosaic_0001>

<llo_original>
// kernel: tpu_custom_call.1
$region0: #{tpu_custom_call.1}
  #allocation0 [shape = 'u32[]', space=smem, size = 0x4, offset = 0x4, fixed_abs, tag = 'smem constant byte address 0x4 - core index']
  #allocation1 [shape = 'u32[144,128]{1,0:T(1,128)}', space=vmem, size = 0x12000, scoped, tag = 'internal scratch']
  %s0 = inlined_call_operand.vmem [shape: f32[96,8], index: 0, kind: input, shape index: {}]
  %s1 = inlined_call_operand.hbm [shape: f32[8,256], index: 1, kind: input, shape index: {}]
  %s2 = inlined_call_operand.vmem [shape: f32[1,256], index: 2, kind: input, shape index: {}]
  %s3 = inlined_call_operand.hbm [shape: bf16[256,128], index: 3, kind: input, shape index: {}]
  %s4 = inlined_call_operand.hbm [shape: f32[1,128], index: 4, kind: input, shape index: {}]
  %s5 = inlined_call_operand.vmem [shape: bf16[128,128], index: 5, kind: input, shape index: {}]
  %s6 = inlined_call_operand.hbm [shape: f32[1,128], index: 6, kind: input, shape index: {}]
  %s7 = inlined_call_operand.vmem [shape: bf16[128,128], index: 7, kind: input, shape index: {}]
  %s8 = inlined_call_operand.vmem [shape: f32[1,128], index: 8, kind: input, shape index: {}]
  %s9 = inlined_call_operand.hbm [shape: bf16[96,128], index: 9, kind: output, shape index: {}]
  %s10 = sld [smem:[#allocation0]]
  $region62: #{tpu_custom_call.1} parent=0
    _
  %s12 = ssub.s32 1, %s10
  %s13 = scalar_select 0, %s12, %s10
  $region1: #{tpu_custom_call.1} parent=0
    #allocation2 [shape = 'u8[8192]{0}', space=vmem, size = 0x2000, scoped, tag = 'input window, operand 1, single buffered']
    #allocation3 [shape = 's32[1]{0}', space=sflag, size = 0x4, scoped, tag = 'scoped memory for tpu_custom_call.1']
    #allocation4 [shape = 's32[1]{0}', space=sflag, size = 0x4, scoped, tag = 'scoped memory for tpu_custom_call.1']
    #allocation5 [shape = 'u8[65536]{0}', space=vmem, size = 0x10000, scoped, tag = 'input window, operand 3, single buffered']
    #allocation6 [shape = 's32[1]{0}', space=sflag, size = 0x4, scoped, tag = 'scoped memory for tpu_custom_call.1']
    #allocation7 [shape = 'u8[512]{0}', space=vmem, size = 0x400, scoped, tag = 'input window, operand 4, single buffered']
    #allocation8 [shape = 'u8[512]{0}', space=vmem, size = 0x400, scoped, tag = 'input window, operand 6, single buffered']
    #allocation9 [shape = 's32[1]{0}', space=sflag, size = 0x4, scoped, tag = 'scoped memory for tpu_custom_call.1']
    #allocation10 [shape = 'u8[24576]{0}', space=vmem, size = 0x6000, scoped, tag = 'output window, operand 0, single buffered']
    %14 = vsyncpa [#allocation3], 0
    %15 = vsyncpa [#allocation6], 0
    %16 = vsyncpa [#allocation9], 0
    %17 = vsyncpa [#allocation4], 0
    // Predicated region
    $region2: #{tpu_custom_call.1} parent=1 // pred_check
      _
    $region3: #{tpu_custom_call.1} parent=1 // pred_check_branch
      %19 = sbr.rel (0) target = $region5
    $region4: #{tpu_custom_call.1} parent=1 // pred_region
      _
    $region5: #{tpu_custom_call.1} parent=1 // pred_fallthru
      _
    // Predicated region
    $region6: #{tpu_custom_call.1} parent=1 // pred_check
      _
    $region7: #{tpu_custom_call.1} parent=1 // pred_check_branch
      %21 = sbr.rel (0) target = $region9
    $region8: #{tpu_custom_call.1} parent=1 // pred_region
      %s23 = ssub.s32 256, 256
      %24 = vsyncadd [#allocation3], %s23
      %s26 = sshll.u32 [#allocation2], 4
      %s27 = int_to_ptr.vmem [resolvable:$true] %s26
      %29 = dma.hbm_to_vmem [thread:$0]  %s1, 256, %s27, [#allocation3]
    $region9: #{tpu_custom_call.1} parent=1 // pred_fallthru
      _
    // Predicated region
    $region10: #{tpu_custom_call.1} parent=1 // pred_check
      _
    $region11: #{tpu_custom_call.1} parent=1 // pred_check_branch
      %31 = sbr.rel (0) target = $region13
    $region12: #{tpu_custom_call.1} parent=1 // pred_region
      _
    $region13: #{tpu_custom_call.1} parent=1 // pred_fallthru
      _
    // Predicated region
    $region14: #{tpu_custom_call.1} parent=1 // pred_check
      _
    $region15: #{tpu_custom_call.1} parent=1 // pred_check_branch
      %33 = sbr.rel (0) target = $region17
    $region16: #{tpu_custom_call.1} parent=1 // pred_region
      %s35 = ssub.s32 2048, 2048
      %36 = vsyncadd [#allocation6], %s35
      %s37 = sshll.u32 [#allocation5], 4
      %s38 = int_to_ptr.vmem [resolvable:$true] %s37
      %43 = dma.hbm_to_vmem [thread:$0]  %s3, 2048, %s38, [#allocation6], 64, 64, 4
    $region17: #{tpu_custom_call.1} parent=1 // pred_fallthru
      _
    // Predicated region
    $region18: #{tpu_custom_call.1} parent=1 // pred_check
      _
    $region19: #{tpu_custom_call.1} parent=1 // pred_check_branch
      %45 = sbr.rel (0) target = $region21
    $region20: #{tpu_custom_call.1} parent=1 // pred_region
      %s47 = ssub.s32 16, 16
      %48 = vsyncadd [#allocation6], %s47
      %s50 = sshll.u32 [#allocation7], 4
      %s51 = int_to_ptr.vmem [resolvable:$true] %s50
      %53 = dma.hbm_to_vmem [thread:$0]  %s4, 16, %s51, [#allocation6]
    $region21: #{tpu_custom_call.1} parent=1 // pred_fallthru
      _
    // Predicated region
    $region22: #{tpu_custom_call.1} parent=1 // pred_check
      _
    $region23: #{tpu_custom_call.1} parent=1 // pred_check_branch
      %55 = sbr.rel (0) target = $region25
    $region24: #{tpu_custom_call.1} parent=1 // pred_region
      _
    $region25: #{tpu_custom_call.1} parent=1 // pred_fallthru
      _
    // Predicated region
    $region26: #{tpu_custom_call.1} parent=1 // pred_check
      _
    $region27: #{tpu_custom_call.1} parent=1 // pred_check_branch
      %57 = sbr.rel (0) target = $region29
    $region28: #{tpu_custom_call.1} parent=1 // pred_region
      %s59 = ssub.s32 16, 16
      %60 = vsyncadd [#allocation9], %s59
      %s62 = sshll.u32 [#allocation8], 4
      %s63 = int_to_ptr.vmem [resolvable:$true] %s62
      %65 = dma.hbm_to_vmem [thread:$0]  %s6, 16, %s63, [#allocation9]
    $region29: #{tpu_custom_call.1} parent=1 // pred_fallthru
      _
    // Predicated region
    $region30: #{tpu_custom_call.1} parent=1 // pred_check
      _
    $region31: #{tpu_custom_call.1} parent=1 // pred_check_branch
      %67 = sbr.rel (0) target = $region33
    $region32: #{tpu_custom_call.1} parent=1 // pred_region
      _
    $region33: #{tpu_custom_call.1} parent=1 // pred_fallthru
      _
    // Predicated region
    $region34: #{tpu_custom_call.1} parent=1 // pred_check
      _
    $region35: #{tpu_custom_call.1} parent=1 // pred_check_branch
      %69 = sbr.rel (0) target = $region37
    $region36: #{tpu_custom_call.1} parent=1 // pred_region
      _
    $region37: #{tpu_custom_call.1} parent=1 // pred_fallthru
      _
    // Predicated region
    $region38: #{tpu_custom_call.1} parent=1 // pred_check
      _
    $region39: #{tpu_custom_call.1} parent=1 // pred_check_branch
      %71 = sbr.rel (0) target = $region41
    $region40: #{tpu_custom_call.1} parent=1 // pred_region
      %72 = dma.done [#allocation3], 256
    $region41: #{tpu_custom_call.1} parent=1 // pred_fallthru
      _
    // Predicated region
    $region42: #{tpu_custom_call.1} parent=1 // pred_check
      _
    $region43: #{tpu_custom_call.1} parent=1 // pred_check_branch
      %74 = sbr.rel (0) target = $region45
    $region44: #{tpu_custom_call.1} parent=1 // pred_region
      %75 = dma.done [#allocation6], 2048
    $region45: #{tpu_custom_call.1} parent=1 // pred_fallthru
      _
    // Predicated region
    $region46: #{tpu_custom_call.1} parent=1 // pred_check
      _
    $region47: #{tpu_custom_call.1} parent=1 // pred_check_branch
      %77 = sbr.rel (0) target = $region49
    $region48: #{tpu_custom_call.1} parent=1 // pred_region
      %78 = dma.done [#allocation6], 16
    $region49: #{tpu_custom_call.1} parent=1 // pred_fallthru
      _
    // Predicated region
    $region50: #{tpu_custom_call.1} parent=1 // pred_check
      _
    $region51: #{tpu_custom_call.1} parent=1 // pred_check_branch
      %80 = sbr.rel (0) target = $region53
    $region52: #{tpu_custom_call.1} parent=1 // pred_region
      %81 = dma.done [#allocation9], 16
    $region53: #{tpu_custom_call.1} parent=1 // pred_fallthru
      _
    %v83 = vld [vmem:[%s0] sm:$0xff]
    %v84 = vld [vmem:[%s0 + $0x8] sm:$0xff]
    %v85 = vld [vmem:[%s0 + $0x10] sm:$0xff]
    %v86 = vld [vmem:[%s0 + $0x18] sm:$0xff]
    %v87 = vld [vmem:[%s0 + $0x20] sm:$0xff]
    %v88 = vld [vmem:[%s0 + $0x28] sm:$0xff]
    %v89 = vld [vmem:[%s0 + $0x30] sm:$0xff]
    %v90 = vld [vmem:[%s0 + $0x38] sm:$0xff]
    %v91 = vld [vmem:[%s0 + $0x40] sm:$0xff]
    %v92 = vld [vmem:[%s0 + $0x48] sm:$0xff]
    %v93 = vld [vmem:[%s0 + $0x50] sm:$0xff]
    %v94 = vld [vmem:[%s0 + $0x58] sm:$0xff]
    %v95 = vld [vmem:[#allocation2] sm:$0xff]
    %v96 = vld [vmem:[#allocation2 + $0x8] sm:$0xff]
    %v97 = vld [vmem:[%s2] sm:$0x3]
    %v99 = vlaneseq
    %v100 = vshrl.u32 %v99, 7
    %v101 = vsub.s32 0, %v100
    %v102 = vrot.slane %v97, %v101
    %v103 = vlaneseq
    %v104 = vshrl.u32 %v103, 7
    %v105 = vsub.s32 1, %v104
    %v106 = vrot.slane %v97, %v105
    %vm109 = vcmask 64512
    %v111 = vsel %vm109, %v83, 0
    %v114 = vsel %vm109, %v84, 0
    %v117 = vsel %vm109, %v85, 0
    %v120 = vsel %vm109, %v86, 0
    %v123 = vsel %vm109, %v87, 0
    %v126 = vsel %vm109, %v88, 0
    %v129 = vsel %vm109, %v89, 0
    %v132 = vsel %vm109, %v90, 0
    %v135 = vsel %vm109, %v91, 0
    %v138 = vsel %vm109, %v92, 0
    %v141 = vsel %vm109, %v93, 0
    %v144 = vsel %vm109, %v94, 0
    %146 = vmatprep.subr.mxu0 %v96
    %147 = vmatpush1.msra.mxu0 %v95
    %148 = vmatprep.subr.mxu0 0.0
    %149 = vmatpush1.msra.mxu0 0.0
    %150 = vmatprep.subr.mxu0 0.0
    %151 = vmatpush1.msra.mxu0 0.0
    %152 = vmatprep.subr.mxu0 0.0
    %153 = vmatpush1.msra.mxu0 0.0
    %154 = vmatprep.subr.mxu0 0.0
    %155 = vmatpush1.msra.mxu0 0.0
    %156 = vmatprep.subr.mxu0 0.0
    %157 = vmatpush1.msra.mxu0 0.0
    %158 = vmatprep.subr.mxu0 0.0
    %159 = vmatpush1.msra.mxu0 0.0
    %160 = vmatprep.subr.mxu0 0.0
    %161 = vmatpush1.msra.mxu0 0.0
    %162 = vmatprep.subr.mxu0 0.0
    %163 = vmatpush1.msra.mxu0 0.0
    %164 = vmatprep.subr.mxu0 0.0
    %165 = vmatpush1.msra.mxu0 0.0
    %166 = vmatprep.subr.mxu0 0.0
    %167 = vmatpush1.msra.mxu0 0.0
    %168 = vmatprep.subr.mxu0 0.0
    %169 = vmatpush1.msra.mxu0 0.0
    %170 = vmatprep.subr.mxu0 0.0
    %171 = vmatpush1.msra.mxu0 0.0
    %172 = vmatprep.subr.mxu0 0.0
    %173 = vmatpush1.msra.mxu0 0.0
    %174 = vmatprep.subr.mxu0 0.0
    %175 = vmatpush1.msra.mxu0 0.0
    %176 = vmatprep.subr.mxu0 0.0
    %177 = vmatpush1.msra.mxu0 0.0
    %178 = vmatprep.subr.mxu0 0.0
    %179 = vmatpush1.msra.mxu0 0.0
    %180 = vmatprep.subr.mxu0 0.0
    %181 = vmatpush1.msra.mxu0 0.0
    %182 = vmatprep.subr.mxu0 0.0
    %183 = vmatpush1.msra.mxu0 0.0
    %184 = vmatprep.subr.mxu0 0.0
    %185 = vmatpush1.msra.mxu0 0.0
    %186 = vmatprep.subr.mxu0 0.0
    %187 = vmatpush1.msra.mxu0 0.0
    %188 = vmatprep.subr.mxu0 0.0
    %189 = vmatpush1.msra.mxu0 0.0
    %190 = vmatprep.subr.mxu0 0.0
    %191 = vmatpush1.msra.mxu0 0.0
    %192 = vmatprep.subr.mxu0 0.0
    %193 = vmatpush1.msra.mxu0 0.0
    %194 = vmatprep.subr.mxu0 0.0
    %195 = vmatpush1.msra.mxu0 0.0
    %196 = vmatprep.subr.mxu0 0.0
    %197 = vmatpush1.msra.mxu0 0.0
    %198 = vmatprep.subr.mxu0 0.0
    %199 = vmatpush1.msra.mxu0 0.0
    %200 = vmatprep.subr.mxu0 0.0
    %201 = vmatpush1.msra.mxu0 0.0
    %202 = vmatprep.subr.mxu0 0.0
    %203 = vmatpush1.msra.mxu0 0.0
    %204 = vmatprep.subr.mxu0 0.0
    %205 = vmatpush1.msra.mxu0 0.0
    %206 = vmatprep.subr.mxu0 0.0
    %207 = vmatpush1.msra.mxu0 0.0
    %208 = vmatprep.subr.mxu0 0.0
    %209 = vmatpush1.msra.mxu0 0.0
    %210 = vmatprep.mubr.f32.mxu0 0.0
    %211 = vmatmul.mubr.f32.gmra.mrb[0].mxu0 %v111
    %v212 = vpop.f32.mrb[0].mxu0
    %v213 = vadd.f32 %v102, %v212
    %v214 = vpop.f32.mrb[0].mxu0
    %v215 = vadd.f32 %v106, %v214
    %216 = vmatprep.mubr.f32.mxu0 0.0
    %217 = vmatmul.mubr.f32.gmra.mrb[0].mxu0 %v114
    %v218 = vpop.f32.mrb[0].mxu0
    %v219 = vadd.f32 %v102, %v218
    %v220 = vpop.f32.mrb[0].mxu0
    %v221 = vadd.f32 %v106, %v220
    %222 = vmatprep.mubr.f32.mxu0 0.0
    %223 = vmatmul.mubr.f32.gmra.mrb[0].mxu0 %v117
    %v224 = vpop.f32.mrb[0].mxu0
    %v225 = vadd.f32 %v102, %v224
    %v226 = vpop.f32.mrb[0].mxu0
    %v227 = vadd.f32 %v106, %v226
    %228 = vmatprep.mubr.f32.mxu0 0.0
    %229 = vmatmul.mubr.f32.gmra.mrb[0].mxu0 %v120
    %v230 = vpop.f32.mrb[0].mxu0
    %v231 = vadd.f32 %v102, %v230
    %v232 = vpop.f32.mrb[0].mxu0
    %v233 = vadd.f32 %v106, %v232
    %234 = vmatprep.mubr.f32.mxu0 0.0
    %235 = vmatmul.mubr.f32.gmra.mrb[0].mxu0 %v123
    %v236 = vpop.f32.mrb[0].mxu0
    %v237 = vadd.f32 %v102, %v236
    %v238 = vpop.f32.mrb[0].mxu0
    %v239 = vadd.f32 %v106, %v238
    %240 = vmatprep.mubr.f32.mxu0 0.0
    %241 = vmatmul.mubr.f32.gmra.mrb[0].mxu0 %v126
    %v242 = vpop.f32.mrb[0].mxu0
    %v243 = vadd.f32 %v102, %v242
    %v244 = vpop.f32.mrb[0].mxu0
    %v245 = vadd.f32 %v106, %v244
    %246 = vmatprep.mubr.f32.mxu0 0.0
    %247 = vmatmul.mubr.f32.gmra.mrb[0].mxu0 %v129
    %v248 = vpop.f32.mrb[0].mxu0
    %v249 = vadd.f32 %v102, %v248
    %v250 = vpop.f32.mrb[0].mxu0
    %v251 = vadd.f32 %v106, %v250
    %252 = vmatprep.mubr.f32.mxu0 0.0
    %253 = vmatmul.mubr.f32.gmra.mrb[0].mxu0 %v132
    %v254 = vpop.f32.mrb[0].mxu0
    %v255 = vadd.f32 %v102, %v254
    %v256 = vpop.f32.mrb[0].mxu0
    %v257 = vadd.f32 %v106, %v256
    %258 = vmatprep.mubr.f32.mxu0 0.0
    %259 = vmatmul.mubr.f32.gmra.mrb[0].mxu0 %v135
    %v260 = vpop.f32.mrb[0].mxu0
    %v261 = vadd.f32 %v102, %v260
    %v262 = vpop.f32.mrb[0].mxu0
    %v263 = vadd.f32 %v106, %v262
    %264 = vmatprep.mubr.f32.mxu0 0.0
    %265 = vmatmul.mubr.f32.gmra.mrb[0].mxu0 %v138
    %v266 = vpop.f32.mrb[0].mxu0
    %v267 = vadd.f32 %v102, %v266
    %v268 = vpop.f32.mrb[0].mxu0
    %v269 = vadd.f32 %v106, %v268
    %270 = vmatprep.mubr.f32.mxu0 0.0
    %271 = vmatmul.mubr.f32.gmra.mrb[0].mxu0 %v141
    %v272 = vpop.f32.mrb[0].mxu0
    %v273 = vadd.f32 %v102, %v272
    %v274 = vpop.f32.mrb[0].mxu0
    %v275 = vadd.f32 %v106, %v274
    %276 = vmatprep.mubr.f32.mxu0 0.0
    %277 = vmatmul.mubr.f32.gmra.mrb[0].mxu0 %v144
    %v278 = vpop.f32.mrb[0].mxu0
    %v279 = vadd.f32 %v102, %v278
    %v280 = vpop.f32.mrb[0].mxu0
    %v281 = vadd.f32 %v106, %v280
    %282 = vdwg.mxu0
    %v283 = vmax.f32 %v213, 0.0
    %v284 = vmax.f32 %v215, 0.0
    %v285 = vmax.f32 %v219, 0.0
    %v286 = vmax.f32 %v221, 0.0
    %v287 = vmax.f32 %v225, 0.0
    %v288 = vmax.f32 %v227, 0.0
    %v289 = vmax.f32 %v231, 0.0
    %v290 = vmax.f32 %v233, 0.0
    %v291 = vmax.f32 %v237, 0.0
    %v292 = vmax.f32 %v239, 0.0
    %v293 = vmax.f32 %v243, 0.0
    %v294 = vmax.f32 %v245, 0.0
    %v295 = vmax.f32 %v249, 0.0
    %v296 = vmax.f32 %v251, 0.0
    %v297 = vmax.f32 %v255, 0.0
    %v298 = vmax.f32 %v257, 0.0
    %v299 = vmax.f32 %v261, 0.0
    %v300 = vmax.f32 %v263, 0.0
    %v301 = vmax.f32 %v267, 0.0
    %v302 = vmax.f32 %v269, 0.0
    %v303 = vmax.f32 %v273, 0.0
    %v304 = vmax.f32 %v275, 0.0
    %v305 = vmax.f32 %v279, 0.0
    %v306 = vmax.f32 %v281, 0.0
    %v307 = vpack.c.bf16 %v285, %v283
    %v308 = vpack.c.bf16 %v286, %v284
    %v309 = vpack.c.bf16 %v289, %v287
    %v310 = vpack.c.bf16 %v290, %v288
    %v311 = vpack.c.bf16 %v293, %v291
    %v312 = vpack.c.bf16 %v294, %v292
    %v313 = vpack.c.bf16 %v297, %v295
    %v314 = vpack.c.bf16 %v298, %v296
    %v315 = vpack.c.bf16 %v301, %v299
    %v316 = vpack.c.bf16 %v302, %v300
    %v317 = vpack.c.bf16 %v305, %v303
    %v318 = vpack.c.bf16 %v306, %v304
    %v319 = vld [vmem:[#allocation5] sm:$0xf]
    %v320 = vld [vmem:[#allocation5 + $0x4] sm:$0xf]
    %v321 = vld [vmem:[#allocation5 + $0x8] sm:$0xf]
    %v322 = vld [vmem:[#allocation5 + $0xc] sm:$0xf]
    %v323 = vld [vmem:[#allocation5 + $0x10] sm:$0xf]
    %v324 = vld [vmem:[#allocation5 + $0x14] sm:$0xf]
    %v325 = vld [vmem:[#allocation5 + $0x18] sm:$0xf]
    %v326 = vld [vmem:[#allocation5 + $0x1c] sm:$0xf]
    %v327 = vld [vmem:[#allocation5 + $0x20] sm:$0xf]
    %v328 = vld [vmem:[#allocation5 + $0x24] sm:$0xf]
    %v329 = vld [vmem:[#allocation5 + $0x28] sm:$0xf]
    %v330 = vld [vmem:[#allocation5 + $0x2c] sm:$0xf]
    %v331 = vld [vmem:[#allocation5 + $0x30] sm:$0xf]
    %v332 = vld [vmem:[#allocation5 + $0x34] sm:$0xf]
    %v333 = vld [vmem:[#allocation5 + $0x38] sm:$0xf]
    %v334 = vld [vmem:[#allocation5 + $0x3c] sm:$0xf]
    %v335 = vld [vmem:[#allocation5 + $0x40] sm:$0xf]
    %v336 = vld [vmem:[#allocation5 + $0x44] sm:$0xf]
    %v337 = vld [vmem:[#allocation5 + $0x48] sm:$0xf]
    %v338 = vld [vmem:[#allocation5 + $0x4c] sm:$0xf]
    %v339 = vld [vmem:[#allocation5 + $0x50] sm:$0xf]
    %v340 = vld [vmem:[#allocation5 + $0x54] sm:$0xf]
    %v341 = vld [vmem:[#allocation5 + $0x58] sm:$0xf]
    %v342 = vld [vmem:[#allocation5 + $0x5c] sm:$0xf]
    %v343 = vld [vmem:[#allocation5 + $0x60] sm:$0xf]
    %v344 = vld [vmem:[#allocation5 + $0x64] sm:$0xf]
    %v345 = vld [vmem:[#allocation5 + $0x68] sm:$0xf]
    %v346 = vld [vmem:[#allocation5 + $0x6c] sm:$0xf]
    %v347 = vld [vmem:[#allocation5 + $0x70] sm:$0xf]
    %v348 = vld [vmem:[#allocation5 + $0x74] sm:$0xf]
    %v349 = vld [vmem:[#allocation5 + $0x78] sm:$0xf]
    %v350 = vld [vmem:[#allocation5 + $0x7c] sm:$0xf]
    %v351 = vld [vmem:[#allocation7] sm:$0x1]
    %v353 = vlaneseq
    %v354 = vshrl.u32 %v353, 7
    %v355 = vsub.s32 0, %v354
    %v356 = vrot.slane %v351, %v355
    %v390 = vunpack.c.l.b16 %v319
    %v391 = vunpack.c.l.b16 %v320
    %v392 = vunpack.c.l.b16 %v321
    %v393 = vunpack.c.l.b16 %v322
    %v394 = vunpack.c.l.b16 %v323
    %v395 = vunpack.c.l.b16 %v324
    %v396 = vunpack.c.l.b16 %v325
    %v397 = vunpack.c.l.b16 %v326
    %v398 = vunpack.c.l.b16 %v327
    %v399 = vunpack.c.l.b16 %v328
    %v400 = vunpack.c.l.b16 %v329
    %v401 = vunpack.c.l.b16 %v330
    %v402 = vunpack.c.l.b16 %v331
    %v403 = vunpack.c.l.b16 %v332
    %v404 = vunpack.c.l.b16 %v333
    %v405 = vunpack.c.l.b16 %v334
    %v406 = vunpack.c.l.b16 %v335
    %v407 = vunpack.c.l.b16 %v336
    %v408 = vunpack.c.l.b16 %v337
    %v409 = vunpack.c.l.b16 %v338
    %v410 = vunpack.c.l.b16 %v339
    %v411 = vunpack.c.l.b16 %v340
    %v412 = vunpack.c.l.b16 %v341
    %v413 = vunpack.c.l.b16 %v342
    %v414 = vunpack.c.l.b16 %v343
    %v415 = vunpack.c.l.b16 %v344
    %v416 = vunpack.c.l.b16 %v345
    %v417 = vunpack.c.l.b16 %v346
    %v418 = vunpack.c.l.b16 %v347
    %v419 = vunpack.c.l.b16 %v348
    %v420 = vunpack.c.l.b16 %v349
    %v421 = vunpack.c.l.b16 %v350
    %v422 = vpack.c.b16 %v391, %v390
    %v423 = vpack.c.b16 %v393, %v392
    %v424 = vpack.c.b16 %v395, %v394
    %v425 = vpack.c.b16 %v397, %v396
    %v426 = vpack.c.b16 %v399, %v398
    %v427 = vpack.c.b16 %v401, %v400
    %v428 = vpack.c.b16 %v403, %v402
    %v429 = vpack.c.b16 %v405, %v404
    %v430 = vpack.c.b16 %v407, %v406
    %v431 = vpack.c.b16 %v409, %v408
    %v432 = vpack.c.b16 %v411, %v410
    %v433 = vpack.c.b16 %v413, %v412
    %v434 = vpack.c.b16 %v415, %v414
    %v435 = vpack.c.b16 %v417, %v416
    %v436 = vpack.c.b16 %v419, %v418
    %v437 = vpack.c.b16 %v421, %v420
    %454 = vmatprep.subr.bf16.mxu0 0
    %455 = vmatpush1.bf16.msra.mxu0 %v422
    %456 = vmatprep.subr.bf16.mxu0 0
    %457 = vmatpush1.bf16.msra.mxu0 %v423
    %458 = vmatprep.subr.bf16.mxu0 0
    %459 = vmatpush1.bf16.msra.mxu0 %v424
    %460 = vmatprep.subr.bf16.mxu0 0
    %461 = vmatpush1.bf16.msra.mxu0 %v425
    %462 = vmatprep.subr.bf16.mxu0 0
    %463 = vmatpush1.bf16.msra.mxu0 %v426
    %464 = vmatprep.subr.bf16.mxu0 0
    %465 = vmatpush1.bf16.msra.mxu0 %v427
    %466 = vmatprep.subr.bf16.mxu0 0
    %467 = vmatpush1.bf16.msra.mxu0 %v428
    %468 = vmatprep.subr.bf16.mxu0 0
    %469 = vmatpush1.bf16.msra.mxu0 %v429
    %470 = vmatprep.subr.bf16.mxu0 0
    %471 = vmatpush1.bf16.msra.mxu0 %v430
    %472 = vmatprep.subr.bf16.mxu0 0
    %473 = vmatpush1.bf16.msra.mxu0 %v431
    %474 = vmatprep.subr.bf16.mxu0 0
    %475 = vmatpush1.bf16.msra.mxu0 %v432
    %476 = vmatprep.subr.bf16.mxu0 0
    %477 = vmatpush1.bf16.msra.mxu0 %v433
    %478 = vmatprep.subr.bf16.mxu0 0
    %479 = vmatpush1.bf16.msra.mxu0 %v434
    %480 = vmatprep.subr.bf16.mxu0 0
    %481 = vmatpush1.bf16.msra.mxu0 %v435
    %482 = vmatprep.subr.bf16.mxu0 0
    %483 = vmatpush1.bf16.msra.mxu0 %v436
    %484 = vmatprep.subr.bf16.mxu0 0
    %485 = vmatpush1.bf16.msra.mxu0 %v437
    %486 = vmatprep.mubr.bf16.mxu0 %v308
    %487 = vmatmul.mubr.bf16.gmra.mrb[0].mxu0 %v307
    %v488 = vpop.f32.mrb[0].mxu0
    %v489 = vadd.f32 %v356, %v488
    %v490 = vpop.f32.mrb[0].mxu0
    %v491 = vpop.f32.mrb[0].mxu0
    %v492 = vadd.f32 %v356, %v491
    %v493 = vpop.f32.mrb[0].mxu0
    %494 = vmatprep.mubr.bf16.mxu0 %v310
    %495 = vmatmul.mubr.bf16.gmra.mrb[0].mxu0 %v309
    %v496 = vpop.f32.mrb[0].mxu0
    %v497 = vadd.f32 %v356, %v496
    %v498 = vpop.f32.mrb[0].mxu0
    %v499 = vpop.f32.mrb[0].mxu0
    %v500 = vadd.f32 %v356, %v499
    %v501 = vpop.f32.mrb[0].mxu0
    %502 = vmatprep.mubr.bf16.mxu0 %v312
    %503 = vmatmul.mubr.bf16.gmra.mrb[0].mxu0 %v311
    %v504 = vpop.f32.mrb[0].mxu0
    %v505 = vadd.f32 %v356, %v504
    %v506 = vpop.f32.mrb[0].mxu0
    %v507 = vpop.f32.mrb[0].mxu0
    %v508 = vadd.f32 %v356, %v507
    %v509 = vpop.f32.mrb[0].mxu0
    %510 = vmatprep.mubr.bf16.mxu0 %v314
    %511 = vmatmul.mubr.bf16.gmra.mrb[0].mxu0 %v313
    %v512 = vpop.f32.mrb[0].mxu0
    %v513 = vadd.f32 %v356, %v512
    %v514 = vpop.f32.mrb[0].mxu0
    %v515 = vpop.f32.mrb[0].mxu0
    %v516 = vadd.f32 %v356, %v515
    %v517 = vpop.f32.mrb[0].mxu0
    %518 = vmatprep.mubr.bf16.mxu0 %v316
    %519 = vmatmul.mubr.bf16.gmra.mrb[0].mxu0 %v315
    %v520 = vpop.f32.mrb[0].mxu0
    %v521 = vadd.f32 %v356, %v520
    %v522 = vpop.f32.mrb[0].mxu0
    %v523 = vpop.f32.mrb[0].mxu0
    %v524 = vadd.f32 %v356, %v523
    %v525 = vpop.f32.mrb[0].mxu0
    %526 = vmatprep.mubr.bf16.mxu0 %v318
    %527 = vmatmul.mubr.bf16.gmra.mrb[0].mxu0 %v317
    %v528 = vpop.f32.mrb[0].mxu0
    %v529 = vadd.f32 %v356, %v528
    %v530 = vpop.f32.mrb[0].mxu0
    %v531 = vpop.f32.mrb[0].mxu0
    %v532 = vadd.f32 %v356, %v531
    %v533 = vpop.f32.mrb[0].mxu0
    %534 = vdwg.mxu0
    %v535 = vmax.f32 %v489, 0.0
    %v536 = vmax.f32 %v492, 0.0
    %v537 = vmax.f32 %v497, 0.0
    %v538 = vmax.f32 %v500, 0.0
    %v539 = vmax.f32 %v505, 0.0
    %v540 = vmax.f32 %v508, 0.0
    %v541 = vmax.f32 %v513, 0.0
    %v542 = vmax.f32 %v516, 0.0
    %v543 = vmax.f32 %v521, 0.0
    %v544 = vmax.f32 %v524, 0.0
    %v545 = vmax.f32 %v529, 0.0
    %v546 = vmax.f32 %v532, 0.0
    %v547 = vpack.c.bf16 %v536, %v535
    %v548 = vpack.c.bf16 %v538, %v537
    %v549 = vpack.c.bf16 %v540, %v539
    %v550 = vpack.c.bf16 %v542, %v541
    %v551 = vpack.c.bf16 %v544, %v543
    %v552 = vpack.c.bf16 %v546, %v545
    %v553 = vld [vmem:[%s5] sm:$0xf]
    %v554 = vld [vmem:[%s5 + $0x4] sm:$0xf]
    %v555 = vld [vmem:[%s5 + $0x8] sm:$0xf]
    %v556 = vld [vmem:[%s5 + $0xc] sm:$0xf]
    %v557 = vld [vmem:[%s5 + $0x10] sm:$0xf]
    %v558 = vld [vmem:[%s5 + $0x14] sm:$0xf]
    %v559 = vld [vmem:[%s5 + $0x18] sm:$0xf]
    %v560 = vld [vmem:[%s5 + $0x1c] sm:$0xf]
    %v561 = vld [vmem:[%s5 + $0x20] sm:$0xf]
    %v562 = vld [vmem:[%s5 + $0x24] sm:$0xf]
    %v563 = vld [vmem:[%s5 + $0x28] sm:$0xf]
    %v564 = vld [vmem:[%s5 + $0x2c] sm:$0xf]
    %v565 = vld [vmem:[%s5 + $0x30] sm:$0xf]
    %v566 = vld [vmem:[%s5 + $0x34] sm:$0xf]
    %v567 = vld [vmem:[%s5 + $0x38] sm:$0xf]
    %v568 = vld [vmem:[%s5 + $0x3c] sm:$0xf]
    %v569 = vld [vmem:[#allocation8] sm:$0x1]
    %v571 = vlaneseq
    %v572 = vshrl.u32 %v571, 7
    %v573 = vsub.s32 0, %v572
    %v574 = vrot.slane %v569, %v573
    %v592 = vunpack.c.l.b16 %v553
    %v593 = vunpack.c.l.b16 %v554
    %v594 = vunpack.c.l.b16 %v555
    %v595 = vunpack.c.l.b16 %v556
    %v596 = vunpack.c.l.b16 %v557
    %v597 = vunpack.c.l.b16 %v558
    %v598 = vunpack.c.l.b16 %v559
    %v599 = vunpack.c.l.b16 %v560
    %v600 = vunpack.c.l.b16 %v561
    %v601 = vunpack.c.l.b16 %v562
    %v602 = vunpack.c.l.b16 %v563
    %v603 = vunpack.c.l.b16 %v564
    %v604 = vunpack.c.l.b16 %v565
    %v605 = vunpack.c.l.b16 %v566
    %v606 = vunpack.c.l.b16 %v567
    %v607 = vunpack.c.l.b16 %v568
    %v608 = vpack.c.b16 %v593, %v592
    %v609 = vpack.c.b16 %v595, %v594
    %v610 = vpack.c.b16 %v597, %v596
    %v611 = vpack.c.b16 %v599, %v598
    %v612 = vpack.c.b16 %v601, %v600
    %v613 = vpack.c.b16 %v603, %v602
    %v614 = vpack.c.b16 %v605, %v604
    %v615 = vpack.c.b16 %v607, %v606
    %624 = vmatprep.subr.bf16.mxu0 0
    %625 = vmatpush1.bf16.msra.mxu0 %v608
    %626 = vmatprep.subr.bf16.mxu0 0
    %627 = vmatpush1.bf16.msra.mxu0 %v609
    %628 = vmatprep.subr.bf16.mxu0 0
    %629 = vmatpush1.bf16.msra.mxu0 %v610
    %630 = vmatprep.subr.bf16.mxu0 0
    %631 = vmatpush1.bf16.msra.mxu0 %v611
    %632 = vmatprep.subr.bf16.mxu0 0
    %633 = vmatpush1.bf16.msra.mxu0 %v612
    %634 = vmatprep.subr.bf16.mxu0 0
    %635 = vmatpush1.bf16.msra.mxu0 %v613
    %636 = vmatprep.subr.bf16.mxu0 0
    %637 = vmatpush1.bf16.msra.mxu0 %v614
    %638 = vmatprep.subr.bf16.mxu0 0
    %639 = vmatpush1.bf16.msra.mxu0 %v615
    %640 = vmatprep.subr.bf16.mxu0 0
    %641 = vmatpush1.bf16.msra.mxu0 0
    %642 = vmatprep.subr.bf16.mxu0 0
    %643 = vmatpush1.bf16.msra.mxu0 0
    %644 = vmatprep.subr.bf16.mxu0 0
    %645 = vmatpush1.bf16.msra.mxu0 0
    %646 = vmatprep.subr.bf16.mxu0 0
    %647 = vmatpush1.bf16.msra.mxu0 0
    %648 = vmatprep.subr.bf16.mxu0 0
    %649 = vmatpush1.bf16.msra.mxu0 0
    %650 = vmatprep.subr.bf16.mxu0 0
    %651 = vmatpush1.bf16.msra.mxu0 0
    %652 = vmatprep.subr.bf16.mxu0 0
    %653 = vmatpush1.bf16.msra.mxu0 0
    %654 = vmatprep.subr.bf16.mxu0 0
    %655 = vmatpush1.bf16.msra.mxu0 0
    %656 = vmatprep.mubr.bf16.mxu0 0
    %657 = vmatmul.mubr.bf16.gmra.mrb[0].mxu0 %v547
    %v658 = vpop.f32.mrb[0].mxu0
    %v659 = vadd.f32 %v574, %v658
    %v660 = vpop.f32.mrb[0].mxu0
    %v661 = vpop.f32.mrb[0].mxu0
    %v662 = vadd.f32 %v574, %v661
    %v663 = vpop.f32.mrb[0].mxu0
    %664 = vmatprep.mubr.bf16.mxu0 0
    %665 = vmatmul.mubr.bf16.gmra.mrb[0].mxu0 %v548
    %v666 = vpop.f32.mrb[0].mxu0
    %v667 = vadd.f32 %v574, %v666
    %v668 = vpop.f32.mrb[0].mxu0
    %v669 = vpop.f32.mrb[0].mxu0
    %v670 = vadd.f32 %v574, %v669
    %v671 = vpop.f32.mrb[0].mxu0
    %672 = vmatprep.mubr.bf16.mxu0 0
    %673 = vmatmul.mubr.bf16.gmra.mrb[0].mxu0 %v549
    %v674 = vpop.f32.mrb[0].mxu0
    %v675 = vadd.f32 %v574, %v674
    %v676 = vpop.f32.mrb[0].mxu0
    %v677 = vpop.f32.mrb[0].mxu0
    %v678 = vadd.f32 %v574, %v677
    %v679 = vpop.f32.mrb[0].mxu0
    %680 = vmatprep.mubr.bf16.mxu0 0
    %681 = vmatmul.mubr.bf16.gmra.mrb[0].mxu0 %v550
    %v682 = vpop.f32.mrb[0].mxu0
    %v683 = vadd.f32 %v574, %v682
    %v684 = vpop.f32.mrb[0].mxu0
    %v685 = vpop.f32.mrb[0].mxu0
    %v686 = vadd.f32 %v574, %v685
    %v687 = vpop.f32.mrb[0].mxu0
    %688 = vmatprep.mubr.bf16.mxu0 0
    %689 = vmatmul.mubr.bf16.gmra.mrb[0].mxu0 %v551
    %v690 = vpop.f32.mrb[0].mxu0
    %v691 = vadd.f32 %v574, %v690
    %v692 = vpop.f32.mrb[0].mxu0
    %v693 = vpop.f32.mrb[0].mxu0
    %v694 = vadd.f32 %v574, %v693
    %v695 = vpop.f32.mrb[0].mxu0
    %696 = vmatprep.mubr.bf16.mxu0 0
    %697 = vmatmul.mubr.bf16.gmra.mrb[0].mxu0 %v552
    %v698 = vpop.f32.mrb[0].mxu0
    %v699 = vadd.f32 %v574, %v698
    %v700 = vpop.f32.mrb[0].mxu0
    %v701 = vpop.f32.mrb[0].mxu0
    %v702 = vadd.f32 %v574, %v701
    %v703 = vpop.f32.mrb[0].mxu0
    %704 = vdwg.mxu0
    %v705 = vmax.f32 %v659, 0.0
    %v706 = vmax.f32 %v662, 0.0
    %v707 = vmax.f32 %v667, 0.0
    %v708 = vmax.f32 %v670, 0.0
    %v709 = vmax.f32 %v675, 0.0
    %v710 = vmax.f32 %v678, 0.0
    %v711 = vmax.f32 %v683, 0.0
    %v712 = vmax.f32 %v686, 0.0
    %v713 = vmax.f32 %v691, 0.0
    %v714 = vmax.f32 %v694, 0.0
    %v715 = vmax.f32 %v699, 0.0
    %v716 = vmax.f32 %v702, 0.0
    %v717 = vpack.c.bf16 %v706, %v705
    %v718 = vpack.c.bf16 %v708, %v707
    %v719 = vpack.c.bf16 %v710, %v709
    %v720 = vpack.c.bf16 %v712, %v711
    %v721 = vpack.c.bf16 %v714, %v713
    %v722 = vpack.c.bf16 %v716, %v715
    %v723 = vld [vmem:[%s7] sm:$0xf]
    %v724 = vld [vmem:[%s7 + $0x4] sm:$0xf]
    %v725 = vld [vmem:[%s7 + $0x8] sm:$0xf]
    %v726 = vld [vmem:[%s7 + $0xc] sm:$0xf]
    %v727 = vld [vmem:[%s7 + $0x10] sm:$0xf]
    %v728 = vld [vmem:[%s7 + $0x14] sm:$0xf]
    %v729 = vld [vmem:[%s7 + $0x18] sm:$0xf]
    %v730 = vld [vmem:[%s7 + $0x1c] sm:$0xf]
    %v731 = vld [vmem:[%s7 + $0x20] sm:$0xf]
    %v732 = vld [vmem:[%s7 + $0x24] sm:$0xf]
    %v733 = vld [vmem:[%s7 + $0x28] sm:$0xf]
    %v734 = vld [vmem:[%s7 + $0x2c] sm:$0xf]
    %v735 = vld [vmem:[%s7 + $0x30] sm:$0xf]
    %v736 = vld [vmem:[%s7 + $0x34] sm:$0xf]
    %v737 = vld [vmem:[%s7 + $0x38] sm:$0xf]
    %v738 = vld [vmem:[%s7 + $0x3c] sm:$0xf]
    %v739 = vld [vmem:[%s8] sm:$0x1]
    %v741 = vlaneseq
    %v742 = vshrl.u32 %v741, 7
    %v743 = vsub.s32 0, %v742
    %v744 = vrot.slane %v739, %v743
    %v762 = vunpack.c.l.b16 %v723
    %v763 = vunpack.c.l.b16 %v724
    %v764 = vunpack.c.l.b16 %v725
    %v765 = vunpack.c.l.b16 %v726
    %v766 = vunpack.c.l.b16 %v727
    %v767 = vunpack.c.l.b16 %v728
    %v768 = vunpack.c.l.b16 %v729
    %v769 = vunpack.c.l.b16 %v730
    %v770 = vunpack.c.l.b16 %v731
    %v771 = vunpack.c.l.b16 %v732
    %v772 = vunpack.c.l.b16 %v733
    %v773 = vunpack.c.l.b16 %v734
    %v774 = vunpack.c.l.b16 %v735
    %v775 = vunpack.c.l.b16 %v736
    %v776 = vunpack.c.l.b16 %v737
    %v777 = vunpack.c.l.b16 %v738
    %v778 = vpack.c.b16 %v763, %v762
    %v779 = vpack.c.b16 %v765, %v764
    %v780 = vpack.c.b16 %v767, %v766
    %v781 = vpack.c.b16 %v769, %v768
    %v782 = vpack.c.b16 %v771, %v770
    %v783 = vpack.c.b16 %v773, %v772
    %v784 = vpack.c.b16 %v775, %v774
    %v785 = vpack.c.b16 %v777, %v776
    %794 = vmatprep.subr.bf16.mxu0 0
    %795 = vmatpush1.bf16.msra.mxu0 %v778
    %796 = vmatprep.subr.bf16.mxu0 0
    %797 = vmatpush1.bf16.msra.mxu0 %v779
    %798 = vmatprep.subr.bf16.mxu0 0
    %799 = vmatpush1.bf16.msra.mxu0 %v780
    %800 = vmatprep.subr.bf16.mxu0 0
    %801 = vmatpush1.bf16.msra.mxu0 %v781
    %802 = vmatprep.subr.bf16.mxu0 0
    %803 = vmatpush1.bf16.msra.mxu0 %v782
    %804 = vmatprep.subr.bf16.mxu0 0
    %805 = vmatpush1.bf16.msra.mxu0 %v783
    %806 = vmatprep.subr.bf16.mxu0 0
    %807 = vmatpush1.bf16.msra.mxu0 %v784
    %808 = vmatprep.subr.bf16.mxu0 0
    %809 = vmatpush1.bf16.msra.mxu0 %v785
    %810 = vmatprep.subr.bf16.mxu0 0
    %811 = vmatpush1.bf16.msra.mxu0 0
    %812 = vmatprep.subr.bf16.mxu0 0
    %813 = vmatpush1.bf16.msra.mxu0 0
    %814 = vmatprep.subr.bf16.mxu0 0
    %815 = vmatpush1.bf16.msra.mxu0 0
    %816 = vmatprep.subr.bf16.mxu0 0
    %817 = vmatpush1.bf16.msra.mxu0 0
    %818 = vmatprep.subr.bf16.mxu0 0
    %819 = vmatpush1.bf16.msra.mxu0 0
    %820 = vmatprep.subr.bf16.mxu0 0
    %821 = vmatpush1.bf16.msra.mxu0 0
    %822 = vmatprep.subr.bf16.mxu0 0
    %823 = vmatpush1.bf16.msra.mxu0 0
    %824 = vmatprep.subr.bf16.mxu0 0
    %825 = vmatpush1.bf16.msra.mxu0 0
    %826 = vmatprep.mubr.bf16.mxu0 0
    %827 = vmatmul.mubr.bf16.gmra.mrb[0].mxu0 %v717
    %v828 = vpop.f32.mrb[0].mxu0
    %v829 = vadd.f32 %v744, %v828
    %v830 = vpop.f32.mrb[0].mxu0
    %v831 = vpop.f32.mrb[0].mxu0
    %v832 = vadd.f32 %v744, %v831
    %v833 = vpop.f32.mrb[0].mxu0
    %834 = vmatprep.mubr.bf16.mxu0 0
    %835 = vmatmul.mubr.bf16.gmra.mrb[0].mxu0 %v718
    %v836 = vpop.f32.mrb[0].mxu0
    %v837 = vadd.f32 %v744, %v836
    %v838 = vpop.f32.mrb[0].mxu0
    %v839 = vpop.f32.mrb[0].mxu0
    %v840 = vadd.f32 %v744, %v839
    %v841 = vpop.f32.mrb[0].mxu0
    %842 = vmatprep.mubr.bf16.mxu0 0
    %843 = vmatmul.mubr.bf16.gmra.mrb[0].mxu0 %v719
    %v844 = vpop.f32.mrb[0].mxu0
    %v845 = vadd.f32 %v744, %v844
    %v846 = vpop.f32.mrb[0].mxu0
    %v847 = vpop.f32.mrb[0].mxu0
    %v848 = vadd.f32 %v744, %v847
    %v849 = vpop.f32.mrb[0].mxu0
    %850 = vmatprep.mubr.bf16.mxu0 0
    %851 = vmatmul.mubr.bf16.gmra.mrb[0].mxu0 %v720
    %v852 = vpop.f32.mrb[0].mxu0
    %v853 = vadd.f32 %v744, %v852
    %v854 = vpop.f32.mrb[0].mxu0
    %v855 = vpop.f32.mrb[0].mxu0
    %v856 = vadd.f32 %v744, %v855
    %v857 = vpop.f32.mrb[0].mxu0
    %858 = vmatprep.mubr.bf16.mxu0 0
    %859 = vmatmul.mubr.bf16.gmra.mrb[0].mxu0 %v721
    %v860 = vpop.f32.mrb[0].mxu0
    %v861 = vadd.f32 %v744, %v860
    %v862 = vpop.f32.mrb[0].mxu0
    %v863 = vpop.f32.mrb[0].mxu0
    %v864 = vadd.f32 %v744, %v863
    %v865 = vpop.f32.mrb[0].mxu0
    %866 = vmatprep.mubr.bf16.mxu0 0
    %867 = vmatmul.mubr.bf16.gmra.mrb[0].mxu0 %v722
    %v868 = vpop.f32.mrb[0].mxu0
    %v869 = vadd.f32 %v744, %v868
    %v870 = vpop.f32.mrb[0].mxu0
    %v871 = vpop.f32.mrb[0].mxu0
    %v872 = vadd.f32 %v744, %v871
    %v873 = vpop.f32.mrb[0].mxu0
    %874 = vdwg.mxu0
    %v875 = vpack.c.bf16 %v832, %v829
    %v876 = vpack.c.bf16 %v840, %v837
    %v877 = vpack.c.bf16 %v848, %v845
    %v878 = vpack.c.bf16 %v856, %v853
    %v879 = vpack.c.bf16 %v864, %v861
    %v880 = vpack.c.bf16 %v872, %v869
    %v887 = vunpack.c.l.b16 %v875
    %v888 = vunpack.c.h.b16 %v875
    %v889 = vunpack.c.l.b16 %v876
    %v890 = vunpack.c.h.b16 %v876
    %v891 = vunpack.c.l.b16 %v877
    %v892 = vunpack.c.h.b16 %v877
    %v893 = vunpack.c.l.b16 %v878
    %v894 = vunpack.c.h.b16 %v878
    %v895 = vunpack.c.l.b16 %v879
    %v896 = vunpack.c.h.b16 %v879
    %v897 = vunpack.c.l.b16 %v880
    %v898 = vunpack.c.h.b16 %v880
    %v899 = vpack.c.b16 %v887, %v887
    %v900 = vpack.c.b16 %v888, %v888
    %v901 = vpack.c.b16 %v889, %v889
    %v902 = vpack.c.b16 %v890, %v890
    %v903 = vpack.c.b16 %v891, %v891
    %v904 = vpack.c.b16 %v892, %v892
    %v905 = vpack.c.b16 %v893, %v893
    %v906 = vpack.c.b16 %v894, %v894
    %v907 = vpack.c.b16 %v895, %v895
    %v908 = vpack.c.b16 %v896, %v896
    %v909 = vpack.c.b16 %v897, %v897
    %v910 = vpack.c.b16 %v898, %v898
    %923 = vst [vmem:[#allocation10] sm:$0xf] %v899
    %924 = vst [vmem:[#allocation10 + $0x4] sm:$0xf] %v900
    %925 = vst [vmem:[#allocation10 + $0x8] sm:$0xf] %v901
    %926 = vst [vmem:[#allocation10 + $0xc] sm:$0xf] %v902
    %927 = vst [vmem:[#allocation10 + $0x10] sm:$0xf] %v903
    %928 = vst [vmem:[#allocation10 + $0x14] sm:$0xf] %v904
    %929 = vst [vmem:[#allocation10 + $0x18] sm:$0xf] %v905
    %930 = vst [vmem:[#allocation10 + $0x1c] sm:$0xf] %v906
    %931 = vst [vmem:[#allocation10 + $0x20] sm:$0xf] %v907
    %932 = vst [vmem:[#allocation10 + $0x24] sm:$0xf] %v908
    %933 = vst [vmem:[#allocation10 + $0x28] sm:$0xf] %v909
    %934 = vst [vmem:[#allocation10 + $0x2c] sm:$0xf] %v910
    // Predicated region
    $region54: #{tpu_custom_call.1} parent=1 // pred_check
      _
    $region55: #{tpu_custom_call.1} parent=1 // pred_check_branch
      %936 = sbr.rel (0) target = $region57
    $region56: #{tpu_custom_call.1} parent=1 // pred_region
      %s938 = ssub.s32 768, 768
      %939 = vsyncadd [#allocation4], %s938
      %s940 = sshll.u32 [#allocation10], 4
      %s941 = int_to_ptr.vmem [resolvable:$true] %s940
      %946 = dma.vmem_to_hbm [thread:$0]  %s941, 768, %s9, [#allocation4], 64, 64, 4
    $region57: #{tpu_custom_call.1} parent=1 // pred_fallthru
      _
    // Predicated region
    $region58: #{tpu_custom_call.1} parent=1 // pred_check
      _
    $region59: #{tpu_custom_call.1} parent=1 // pred_check_branch
      %948 = sbr.rel (0) target = $region61
    $region60: #{tpu_custom_call.1} parent=1 // pred_region
      %949 = dma.done [#allocation4], 768
    $region61: #{tpu_custom_call.1} parent=1 // pred_fallthru
      _
    %950 = vsyncpa [#allocation3], 1
    %951 = vsyncpa [#allocation6], 1
    %952 = vsyncpa [#allocation9], 1
    %953 = vsyncpa [#allocation4], 1

</llo_original>
